<compile_context>
chip_gen: v5e
topology: v5e:2x2
jax: 0.10.0
libtpu: 0.0.40
codegen_flags: <defaults>
</compile_context>

<pallas_src>
import functools
import math

import jax
import jax.numpy as jnp
from jax.experimental import pallas as pl
from jax.experimental.pallas import tpu as pltpu


def _round_up(n, m):
    return ((n + m - 1) // m) * m


# ---------------------------------------------------------------------------
# Pass 1: SpatialConv + FIRConv (stacked Toeplitz MXU matmul) + BN1 stats.
# ---------------------------------------------------------------------------
def _pass1_kernel(x_ref, wsp_ref, wtoe_ref, xsub_ref, stats_ref, y_scr, *,
                  Bb, S, mxu_bf16):
    # x_ref: (Bb, C, T)   wsp_ref: (S, C)   wtoe_ref: (T, F*P)
    # y_scr: (Bb*S, T)    xsub_ref: (Bb*S, F*P)    stats_ref: (2, F*P)
    wsp = wsp_ref[...]
    # Spatial conv per batch element (tiny K=C), stacked into one MXU LHS.
    for b in range(Bb):                                   # static unroll
        y_scr[b * S:(b + 1) * S, :] = jnp.dot(
            wsp, x_ref[b], preferred_element_type=jnp.float32)
    lhs = y_scr[...]
    if mxu_bf16:                                          # v6e/v7x bf16 MXU path
        lhs = lhs.astype(jnp.bfloat16)
    # Single wide Toeplitz matmul: (Bb*S, T) @ (T, F*P), f32 accumulation.
    fir = jnp.dot(lhs, wtoe_ref[...], preferred_element_type=jnp.float32)
    xsub_ref[...] = fir                                   # one lane-dense store
    # BN1 partial stats: column sums of x_sub and x_sub^2 (padded columns and
    # zero-padded batch rows contribute exactly 0).
    stats_ref[0:1, :] = jnp.sum(fir, axis=0, keepdims=True)
    stats_ref[1:2, :] = jnp.sum(fir * fir, axis=0, keepdims=True)


# ---------------------------------------------------------------------------
# Pass 2: (BN1 folded into) GroupConv + amplitude + BN2 partial stats.
#   gp_ref: flat SMEM table, 6 floats per FIR band f:
#     [we0*inv1, we1*inv1, even_bias, wo0*inv1, wo1*inv1, odd_bias]
#   so  ge = gp0*x[t] + gp1*x[t+dn] + gp2  ==  we0*xn[t] + we1*xn[t+dn]
#   with xn = (x - mean1)*inv1 (exact algebraic fold of BN1).
# ---------------------------------------------------------------------------
def _pass2_kernel(gp_ref, xsub_ref, xam_ref, stats2_ref, *,
                  F, DN, T3, P, rows, valid_rows):
    lane = jax.lax.broadcasted_iota(jnp.int32, (rows, P), 1)
    row = (jax.lax.broadcasted_iota(jnp.int32, (rows, P), 0)
           + pl.program_id(0) * rows)
    # Mask lane padding (t >= T3) and zero-padded batch rows (BN2-stat purity).
    valid = (lane < T3) & (row < valid_rows)
    ssum = jnp.zeros((rows, 1), jnp.float32)
    ssq = jnp.zeros((rows, 1), jnp.float32)
    for f in range(F):                                    # small static loop
        x = xsub_ref[:, f * P:(f + 1) * P]                # 128-aligned free view
        # xr[:, t] = x[:, (t + DN) % P]; wrapped lanes only land in t >= T3.
        xr = pltpu.roll(x, shift=P - DN, axis=1)          # XLU rotate (free slot)
        ge = gp_ref[6 * f + 0] * x + gp_ref[6 * f + 1] * xr + gp_ref[6 * f + 2]
        go = gp_ref[6 * f + 3] * x + gp_ref[6 * f + 4] * xr + gp_ref[6 * f + 5]
        am = jnp.sqrt(ge * ge + go * go)
        am = jnp.where(valid, am, 0.0)
        xam_ref[:, f * P:(f + 1) * P] = am                # aligned 128-lane store
        ssum = ssum + jnp.sum(am, axis=1, keepdims=True)
        ssq = ssq + jnp.sum(am * am, axis=1, keepdims=True)
    # Tiny (rows, 2) stats store; a few hundred bytes per step (negligible).
    stats2_ref[:, 0:1] = ssum
    stats2_ref[:, 1:2] = ssq


# ---------------------------------------------------------------------------
# Wrapper helpers
# ---------------------------------------------------------------------------
def _fir_toeplitz(w_fir, T, T2, P):
    """(T, F*P) matrix s.t.  y (M,T) @ W == valid FIR cross-correlation,
    padded with zero columns up to P lanes per band."""
    F, L = w_fir.shape
    t = jnp.arange(T)[:, None]                  # (T, 1)
    j = jnp.arange(P)[None, :]                  # (1, P)
    k = t - j
    valid = (k >= 0) & (k < L) & (j < T2)
    taps = w_fir[:, jnp.clip(k, 0, L - 1)]      # (F, T, P)
    wt = jnp.where(valid[None], taps, 0.0)
    return jnp.transpose(wt, (1, 0, 2)).reshape(T, F * P)


def _pick_batch_block(B, C, T, S, F, P):
    """Batch-block size from a v7x-safe VMEM budget (64 MiB physical there)."""
    budget = 24 * 1024 * 1024
    try:
        budget = min(budget, pltpu.get_tpu_info().vmem_capacity_bytes // 3)
    except Exception:  # noqa: BLE001 - fall back to conservative budget
        pass
    per_b = 4 * (2 * C * T + 4 * S * F * P + S * T)       # dbl-buffered blocks + scratch
    fixed = 4 * (2 * T * F * P + S * C + 4 * F * P)       # Toeplitz weight etc.
    bb = max(1, (budget - fixed) // max(per_b, 1))
    bb = int(min(B, 32, bb))                               # M = Bb*S >= 256 for S>=8
    # rows = Bb*S must be sublane-tileable (multiple of 8) for the 2-D blocks.
    mult = 8 // math.gcd(S, 8)
    bb = ((bb + mult - 1) // mult) * mult
    return max(bb, mult)


# ---------------------------------------------------------------------------
# Forward
# ---------------------------------------------------------------------------
@functools.partial(jax.jit, static_argnames=("delta_n", "mxu_bf16"))
def donet_forward(x, w_spatial, w_fir, w_group, w_class, *, delta_n,
                  mxu_bf16=False):
    """x: (B, 1, C, T) float32, like the PyTorch module.

    w_spatial: (S, C)              SpatialConv weight (squeezed)
    w_fir:     (F, L)              FIRConv weight (squeezed, frozen FIR bank)
    w_group:   (2F, 2)             GroupConv weight (squeezed)
    w_class:   (n_class, S, F, 1)  ClassConv weight (PyTorch layout)
    """
    B, _, C, T = x.shape
    S = w_spatial.shape[0]
    F, L = w_fir.shape
    T2 = T - L + 1
    T3 = T2 - delta_n
    P = _round_up(T2, 128)        # lane-dense padded width for all time dims
    eps = 1e-5

    Bb = _pick_batch_block(B, C, T, S, F, P)
    B_pad = _round_up(B, Bb)
    G = B_pad // Bb               # NOTE(v7x): for large B this is >= 2 grid
    rows = Bb * S                 # steps so megacore "parallel" can shard.

    x3 = x[:, 0, :, :].astype(jnp.float32)
    if B_pad != B:
        x3 = jnp.pad(x3, ((0, B_pad - B), (0, 0), (0, 0)))
    wsp = w_spatial.astype(jnp.float32)
    wt_dtype = jnp.bfloat16 if mxu_bf16 else jnp.float32
    wtoe = _fir_toeplitz(w_fir.astype(jnp.float32), T, T2, P).astype(wt_dtype)

    cparams = pltpu.CompilerParams(
        dimension_semantics=("parallel",),
        vmem_limit_bytes=32 * 1024 * 1024,
    )

    # ------------------------- pass 1 -------------------------
    pass1 = pl.pallas_call(
        functools.partial(_pass1_kernel, Bb=Bb, S=S, mxu_bf16=mxu_bf16),
        grid_spec=pltpu.PrefetchScalarGridSpec(
            num_scalar_prefetch=0,
            grid=(G,),
            in_specs=[
                pl.BlockSpec((Bb, C, T), lambda g: (g, 0, 0)),
                pl.BlockSpec((S, C), lambda g: (0, 0)),
                pl.BlockSpec((T, F * P), lambda g: (0, 0)),
            ],
            out_specs=(
                pl.BlockSpec((rows, F * P), lambda g: (g, 0)),
                pl.BlockSpec((None, 2, F * P), lambda g: (g, 0, 0)),
            ),
            scratch_shapes=[pltpu.VMEM((rows, T), jnp.float32)],
        ),
        out_shape=(
            jax.ShapeDtypeStruct((B_pad * S, F * P), jnp.float32),  # x_sub slab
            jax.ShapeDtypeStruct((G, 2, F * P), jnp.float32),       # BN1 partials
        ),
        compiler_params=cparams,
    )
    x_sub_flat, stats1 = pass1(x3, wsp, wtoe)

    # BN1 batch stats (tiny glue) + fold into GroupConv taps.
    n1 = float(B * S * T2)
    csum = jnp.sum(stats1[:, 0, :], axis=0).reshape(F, P)
    csq = jnp.sum(stats1[:, 1, :], axis=0).reshape(F, P)
    mean1 = jnp.sum(csum, axis=1) / n1                               # (F,)
    var1 = jnp.maximum(jnp.sum(csq, axis=1) / n1 - mean1 * mean1, 0.0)
    inv1 = jax.lax.rsqrt(var1 + eps)

    wg = w_group.astype(jnp.float32)                                  # (2F, 2)
    inv1r = jnp.repeat(inv1, 2)                                       # per out-channel
    mean1r = jnp.repeat(mean1, 2)
    wg_scaled = wg * inv1r[:, None]
    wg_bias = -inv1r * mean1r * jnp.sum(wg, axis=1)
    gp = jnp.concatenate([wg_scaled, wg_bias[:, None]], axis=1).reshape(-1)  # (6F,)

    # ------------------------- pass 2 -------------------------
    pass2 = pl.pallas_call(
        functools.partial(_pass2_kernel, F=F, DN=delta_n, T3=T3, P=P,
                          rows=rows, valid_rows=B * S),
        grid_spec=pltpu.PrefetchScalarGridSpec(
            num_scalar_prefetch=1,                        # gp -> SMEM table
            grid=(G,),
            in_specs=[pl.BlockSpec((rows, F * P), lambda g, gp: (g, 0))],
            out_specs=(
                pl.BlockSpec((rows, F * P), lambda g, gp: (g, 0)),
                pl.BlockSpec((rows, 2), lambda g, gp: (g, 0)),
            ),
        ),
        out_shape=(
            jax.ShapeDtypeStruct((B_pad * S, F * P), jnp.float32),   # x_am slab
            jax.ShapeDtypeStruct((B_pad * S, 2), jnp.float32),       # BN2 partials
        ),
        compiler_params=cparams,
    )
    x_am_flat, stats2 = pass2(gp, x_sub_flat)

    # BN2 batch stats (tiny glue).
    n2 = float(B * F * T3)
    st2 = stats2[:B * S].reshape(B, S, 2)
    mean2 = jnp.sum(st2[..., 0], axis=0) / n2                         # (S,)
    var2 = jnp.maximum(jnp.sum(st2[..., 1], axis=0) / n2 - mean2 * mean2, 0.0)
    inv2 = jax.lax.rsqrt(var2 + eps)

    # User-facing layouts (cheap wrapper reshapes / slices).
    x_sub = (x_sub_flat[:B * S].reshape(B, S, F, P)
             .transpose(0, 2, 1, 3))[..., :T2]                        # (B,F,S,T2)
    x_am = (x_am_flat[:B * S].reshape(B, S, F, P)
            .transpose(0, 2, 1, 3))[..., :T3]                         # (B,F,S,T3)

    # ClassConv (BN2 applied) + log-softmax: ~12K MACs/elem, done in XLA on the
    # already-materialized x_am (review option (a) -- no 3rd kernel launch).
    wcls = w_class[..., 0].astype(jnp.float32)                        # (n_class,S,F)
    xn = (x_am - mean2[None, None, :, None]) * inv2[None, None, :, None]
    logits = jnp.einsum('csf,bfst->bct', wcls, xn)                    # (B,n_class,T3)
    log_probs = jax.nn.log_softmax(logits, axis=1)
    return log_probs, x_sub, x_am


# ---------------------------------------------------------------------------
# Deterministic synthetic parameters (shapes from the module's __init__).
# ---------------------------------------------------------------------------
def _xavier_uniform(key, shape):
    rfs = 1
    for d in shape[2:]:
        rfs *= d
    fan_in = shape[1] * rfs
    fan_out = shape[0] * rfs
    a = (6.0 / (fan_in + fan_out)) ** 0.5
    return jax.random.uniform(key, shape, jnp.float32, -a, a)


def _create_filter(fs, fl, fh, length):
    # Hamming-windowed ideal band-pass FIR — deterministic stand-in for
    # DoNet's (unprovided) create_filter helper.
    m = jnp.arange(length, dtype=jnp.float32) - (length - 1) / 2.0

    def lowpass(fc):
        return 2.0 * fc / fs * jnp.sinc(2.0 * fc / fs * m)

    h = lowpass(fh) - lowpass(fl)
    n = jnp.arange(length, dtype=jnp.float32)
    win = 0.54 - 0.46 * jnp.cos(2.0 * jnp.pi * n / (length - 1))
    return (h * win).astype(jnp.float32)


if __name__ == "__main__":
    B = 2
    input_channel = 4          # EEG electrodes
    n_class = 3
    n_spatial = 8
    fir_bank = [(4.0, 8.0), (8.0, 13.0)]   # n_fir = 2 frequency bands
    fir_length = 9
    delta_n = 8
    T = 128                    # time samples

    n_fir = len(fir_bank)
    key = jax.random.PRNGKey(0)
    kx, k1, k2, k3 = jax.random.split(key, 4)

    x = jax.random.normal(kx, (B, 1, input_channel, T), jnp.float32)

    w_spatial = _xavier_uniform(
        k1, (n_spatial, 1, input_channel, 1)).reshape(n_spatial, input_channel)
    w_group = _xavier_uniform(k2, (2 * n_fir, 1, 1, 2)).reshape(2 * n_fir, 2)
    w_class = _xavier_uniform(k3, (n_class, n_spatial, n_fir, 1))
    w_fir = jnp.stack(
        [_create_filter(250.0, lo, hi, fir_length) for lo, hi in fir_bank],
        axis=0)                                   # (n_fir, fir_length), frozen

    out, x_sub, x_am = donet_forward(
        x, w_spatial, w_fir, w_group, w_class, delta_n=delta_n, mxu_bf16=False)
    jax.block_until_ready((out, x_sub, x_am))

    T2 = T - fir_length + 1
    T3 = T2 - delta_n
    assert out.shape == (B, n_class, T3)
    assert x_sub.shape == (B, n_fir, n_spatial, T2)
    assert x_am.shape == (B, n_fir, n_spatial, T3)
    assert bool(jnp.all(jnp.isfinite(out)))
    assert bool(jnp.all(jnp.isfinite(x_sub)))
    assert bool(jnp.all(jnp.isfinite(x_am)))
    print("KERNEL_OK")
</pallas_src>

<mosaic_0001>
module attributes {stable_mosaic.version = 11 : i64} {
  func.func @_pass1_kernel(%arg0: i32, %arg1: memref<2x4x128xf32, #tpu.memory_space<vmem>>, %arg2: memref<8x4xf32, #tpu.memory_space<vmem>>, %arg3: memref<128x256xf32, #tpu.memory_space<vmem>>, %arg4: memref<16x256xf32, #tpu.memory_space<vmem>>, %arg5: memref<1x2x256xf32, #tpu.memory_space<vmem>>, %arg6: memref<16x128xf32, #tpu.memory_space<vmem>>) attributes {dimension_semantics = [#tpu.dimension_semantics<parallel>], iteration_bounds = array<i64: 1>, scalar_prefetch = 0 : i64, scratch_operands = 1 : i64, tpu.core_type = #tpu.core_type<tc>, window_params = [{transform_indices = @transform_0, window_bounds = array<i64: 2, 4, 128>}, {pipeline_mode = #tpu.pipeline_mode<synchronous>, transform_indices = @transform_1, window_bounds = array<i64: 8, 4>}, {pipeline_mode = #tpu.pipeline_mode<synchronous>, transform_indices = @transform_2, window_bounds = array<i64: 128, 256>}, {transform_indices = @transform_3, window_bounds = array<i64: 16, 256>}, {transform_indices = @transform_4, window_bounds = array<i64: 1, 2, 256>}]} {
    %c0 = arith.constant 0 : index
    %c0_0 = arith.constant 0 : index
    %0 = vector.load %arg2[%c0, %c0_0] : memref<8x4xf32, #tpu.memory_space<vmem>>, vector<8x4xf32>
    %c0_1 = arith.constant 0 : index
    %c0_2 = arith.constant 0 : index
    %c0_3 = arith.constant 0 : index
    %1 = vector.load %arg1[%c0_1, %c0_2, %c0_3] : memref<2x4x128xf32, #tpu.memory_space<vmem>>, vector<1x4x128xf32>
    %2 = vector.shape_cast %1 : vector<1x4x128xf32> to vector<4x128xf32>
    %cst = arith.constant dense<0.000000e+00> : vector<8x128xf32>
    %3 = tpu.matmul %0, %2, %cst {dimension_numbers = #tpu.dot_dimension_numbers<[1], [0], [0], [1], [0, 0, 1, 1], [], []>} : vector<8x4xf32>, vector<4x128xf32>, vector<8x128xf32> -> vector<8x128xf32>
    %c0_4 = arith.constant 0 : index
    %c0_5 = arith.constant 0 : index
    %4 = vector.load %arg6[%c0_4, %c0_5] : memref<16x128xf32, #tpu.memory_space<vmem>>, vector<8x128xf32>
    tpu.vector_store %arg6[%c0_4, %c0_5], %3 {strides = array<i32>} : memref<16x128xf32, #tpu.memory_space<vmem>>, vector<8x128xf32>,
    %c1 = arith.constant 1 : index
    %c0_6 = arith.constant 0 : index
    %c0_7 = arith.constant 0 : index
    %5 = vector.load %arg1[%c1, %c0_6, %c0_7] : memref<2x4x128xf32, #tpu.memory_space<vmem>>, vector<1x4x128xf32>
    %6 = vector.shape_cast %5 : vector<1x4x128xf32> to vector<4x128xf32>
    %cst_8 = arith.constant dense<0.000000e+00> : vector<8x128xf32>
    %7 = tpu.matmul %0, %6, %cst_8 {dimension_numbers = #tpu.dot_dimension_numbers<[1], [0], [0], [1], [0, 0, 1, 1], [], []>} : vector<8x4xf32>, vector<4x128xf32>, vector<8x128xf32> -> vector<8x128xf32>
    %c8 = arith.constant 8 : index
    %c0_9 = arith.constant 0 : index
    %8 = vector.load %arg6[%c8, %c0_9] : memref<16x128xf32, #tpu.memory_space<vmem>>, vector<8x128xf32>
    tpu.vector_store %arg6[%c8, %c0_9], %7 {strides = array<i32>} : memref<16x128xf32, #tpu.memory_space<vmem>>, vector<8x128xf32>,
    %c0_10 = arith.constant 0 : index
    %c0_11 = arith.constant 0 : index
    %9 = vector.load %arg6[%c0_10, %c0_11] : memref<16x128xf32, #tpu.memory_space<vmem>>, vector<16x128xf32>
    %c0_12 = arith.constant 0 : index
    %c0_13 = arith.constant 0 : index
    %10 = vector.load %arg3[%c0_12, %c0_13] : memref<128x256xf32, #tpu.memory_space<vmem>>, vector<128x256xf32>
    %cst_14 = arith.constant dense<0.000000e+00> : vector<16x256xf32>
    %11 = tpu.matmul %9, %10, %cst_14 {dimension_numbers = #tpu.dot_dimension_numbers<[1], [0], [0], [1], [0, 0, 1, 1], [], []>} : vector<16x128xf32>, vector<128x256xf32>, vector<16x256xf32> -> vector<16x256xf32>
    %c0_15 = arith.constant 0 : index
    %c0_16 = arith.constant 0 : index
    %12 = vector.load %arg4[%c0_15, %c0_16] : memref<16x256xf32, #tpu.memory_space<vmem>>, vector<16x256xf32>
    tpu.vector_store %arg4[%c0_15, %c0_16], %11 {strides = array<i32>} : memref<16x256xf32, #tpu.memory_space<vmem>>, vector<16x256xf32>,
    %cst_17 = arith.constant dense<0.000000e+00> : vector<256xf32>
    %13 = vector.multi_reduction <add>, %11, %cst_17 [0] : vector<16x256xf32> to vector<256xf32>
    %14 = vector.shape_cast %13 : vector<256xf32> to vector<1x256xf32>
    %c0_18 = arith.constant 0 : index
    %c0_19 = arith.constant 0 : index
    %c0_20 = arith.constant 0 : index
    %15 = vector.load %arg5[%c0_18, %c0_19, %c0_20] : memref<1x2x256xf32, #tpu.memory_space<vmem>>, vector<1x1x256xf32>
    %16 = vector.shape_cast %15 : vector<1x1x256xf32> to vector<1x256xf32>
    %17 = vector.shape_cast %14 : vector<1x256xf32> to vector<1x1x256xf32>
    tpu.vector_store %arg5[%c0_18, %c0_19, %c0_20], %17 {strides = array<i32>} : memref<1x2x256xf32, #tpu.memory_space<vmem>>, vector<1x1x256xf32>,
    %18 = arith.mulf %11, %11 : vector<16x256xf32>
    %cst_21 = arith.constant dense<0.000000e+00> : vector<256xf32>
    %19 = vector.multi_reduction <add>, %18, %cst_21 [0] : vector<16x256xf32> to vector<256xf32>
    %20 = vector.shape_cast %19 : vector<256xf32> to vector<1x256xf32>
    %c0_22 = arith.constant 0 : index
    %c1_23 = arith.constant 1 : index
    %c0_24 = arith.constant 0 : index
    %21 = vector.load %arg5[%c0_22, %c1_23, %c0_24] : memref<1x2x256xf32, #tpu.memory_space<vmem>>, vector<1x1x256xf32>
    %22 = vector.shape_cast %21 : vector<1x1x256xf32> to vector<1x256xf32>
    %23 = vector.shape_cast %20 : vector<1x256xf32> to vector<1x1x256xf32>
    tpu.vector_store %arg5[%c0_22, %c1_23, %c0_24], %23 {strides = array<i32>} : memref<1x2x256xf32, #tpu.memory_space<vmem>>, vector<1x1x256xf32>,
    return
  }
  func.func @transform_0(%arg0: i32) -> (i32, i32, i32) {
    %c0_i32 = arith.constant 0 : i32
    %c0_i32_0 = arith.constant 0 : i32
    %c0_i32_1 = arith.constant 0 : i32
    return %arg0, %c0_i32, %c0_i32_0 : i32, i32, i32
  }
  func.func @transform_1(%arg0: i32) -> (i32, i32) {
    %c0_i32 = arith.constant 0 : i32
    %c0_i32_0 = arith.constant 0 : i32
    %c0_i32_1 = arith.constant 0 : i32
    return %c0_i32, %c0_i32_0 : i32, i32
  }
  func.func @transform_2(%arg0: i32) -> (i32, i32) {
    %c0_i32 = arith.constant 0 : i32
    %c0_i32_0 = arith.constant 0 : i32
    %c0_i32_1 = arith.constant 0 : i32
    return %c0_i32, %c0_i32_0 : i32, i32
  }
  func.func @transform_3(%arg0: i32) -> (i32, i32) {
    %c0_i32 = arith.constant 0 : i32
    %c0_i32_0 = arith.constant 0 : i32
    return %arg0, %c0_i32 : i32, i32
  }
  func.func @transform_4(%arg0: i32) -> (i32, i32, i32) {
    %c0_i32 = arith.constant 0 : i32
    %c0_i32_0 = arith.constant 0 : i32
    %c0_i32_1 = arith.constant 0 : i32
    return %arg0, %c0_i32, %c0_i32_0 : i32, i32, i32
  }
}

module attributes {stable_mosaic.version = 11 : i64} {
  func.func @_pass2_kernel(%arg0: i32, %arg1: memref<12xf32, #tpu.memory_space<smem>>, %arg2: memref<16x256xf32, #tpu.memory_space<vmem>>, %arg3: memref<16x256xf32, #tpu.memory_space<vmem>>, %arg4: memref<16x2xf32, #tpu.memory_space<vmem>>) attributes {dimension_semantics = [#tpu.dimension_semantics<parallel>], iteration_bounds = array<i64: 1>, scalar_prefetch = 1 : i64, scratch_operands = 0 : i64, tpu.core_type = #tpu.core_type<tc>, window_params = [{transform_indices = @transform_0, window_bounds = array<i64: 16, 256>}, {transform_indices = @transform_1, window_bounds = array<i64: 16, 256>}, {transform_indices = @transform_2, window_bounds = array<i64: 16, 2>}]} {
    %0 = tpu.iota {dimensions = array<i32: 1>} : vector<16x128xi32>
    %1 = tpu.iota {dimensions = array<i32: 0>} : vector<16x128xi32>
    %c16_i32 = arith.constant 16 : i32
    %2 = arith.muli %arg0, %c16_i32 : i32
    %3 = vector.broadcast %2 : i32 to vector<16x128xi32>
    %4 = arith.addi %1, %3 : vector<16x128xi32>
    %c112_i32 = arith.constant 112 : i32
    %5 = vector.broadcast %c112_i32 : i32 to vector<16x128xi32>
    %6 = arith.cmpi slt, %0, %5 : vector<16x128xi32>
    %c16_i32_0 = arith.constant 16 : i32
    %7 = vector.broadcast %c16_i32_0 : i32 to vector<16x128xi32>
    %8 = arith.cmpi slt, %4, %7 : vector<16x128xi32>
    %9 = arith.andi %6, %8 : vector<16x128xi1>
    %cst = arith.constant 0.000000e+00 : f32
    %10 = vector.broadcast %cst : f32 to vector<16x1xf32>
    %cst_1 = arith.constant 0.000000e+00 : f32
    %11 = vector.broadcast %cst_1 : f32 to vector<16x1xf32>
    %c0 = arith.constant 0 : index
    %c0_2 = arith.constant 0 : index
    %12 = vector.load %arg2[%c0, %c0_2] : memref<16x256xf32, #tpu.memory_space<vmem>>, vector<16x128xf32>
    %c120_i32 = arith.constant 120 : i32
    %13 = tpu.dynamic_rotate %12 by %c120_i32 dim 1 : vector<16x128xf32>, i32 -> vector<16x128xf32>
    %c0_3 = arith.constant 0 : index
    %14 = memref.load %arg1[%c0_3] : memref<12xf32, #tpu.memory_space<smem>>
    %15 = vector.broadcast %14 : f32 to vector<16x128xf32>
    %16 = arith.mulf %15, %12 : vector<16x128xf32>
    %c1 = arith.constant 1 : index
    %17 = memref.load %arg1[%c1] : memref<12xf32, #tpu.memory_space<smem>>
    %18 = vector.broadcast %17 : f32 to vector<16x128xf32>
    %19 = arith.mulf %18, %13 : vector<16x128xf32>
    %20 = arith.addf %16, %19 : vector<16x128xf32>
    %c2 = arith.constant 2 : index
    %21 = memref.load %arg1[%c2] : memref<12xf32, #tpu.memory_space<smem>>
    %22 = vector.broadcast %21 : f32 to vector<16x128xf32>
    %23 = arith.addf %20, %22 : vector<16x128xf32>
    %c3 = arith.constant 3 : index
    %24 = memref.load %arg1[%c3] : memref<12xf32, #tpu.memory_space<smem>>
    %25 = vector.broadcast %24 : f32 to vector<16x128xf32>
    %26 = arith.mulf %25, %12 : vector<16x128xf32>
    %c4 = arith.constant 4 : index
    %27 = memref.load %arg1[%c4] : memref<12xf32, #tpu.memory_space<smem>>
    %28 = vector.broadcast %27 : f32 to vector<16x128xf32>
    %29 = arith.mulf %28, %13 : vector<16x128xf32>
    %30 = arith.addf %26, %29 : vector<16x128xf32>
    %c5 = arith.constant 5 : index
    %31 = memref.load %arg1[%c5] : memref<12xf32, #tpu.memory_space<smem>>
    %32 = vector.broadcast %31 : f32 to vector<16x128xf32>
    %33 = arith.addf %30, %32 : vector<16x128xf32>
    %34 = arith.mulf %23, %23 : vector<16x128xf32>
    %35 = arith.mulf %33, %33 : vector<16x128xf32>
    %36 = arith.addf %34, %35 : vector<16x128xf32>
    %37 = math.sqrt %36 : vector<16x128xf32>
    %cst_4 = arith.constant 0.000000e+00 : f32
    %38 = vector.broadcast %cst_4 : f32 to vector<16x128xf32>
    %39 = arith.select %9, %37, %38 : vector<16x128xi1>, vector<16x128xf32>
    %c0_5 = arith.constant 0 : index
    %c0_6 = arith.constant 0 : index
    %40 = vector.load %arg3[%c0_5, %c0_6] : memref<16x256xf32, #tpu.memory_space<vmem>>, vector<16x128xf32>
    tpu.vector_store %arg3[%c0_5, %c0_6], %39 {strides = array<i32>} : memref<16x256xf32, #tpu.memory_space<vmem>>, vector<16x128xf32>,
    %cst_7 = arith.constant dense<0.000000e+00> : vector<16xf32>
    %41 = vector.multi_reduction <add>, %39, %cst_7 [1] : vector<16x128xf32> to vector<16xf32>
    %42 = vector.shape_cast %41 : vector<16xf32> to vector<16x1xf32>
    %43 = arith.addf %10, %42 : vector<16x1xf32>
    %44 = arith.mulf %39, %39 : vector<16x128xf32>
    %cst_8 = arith.constant dense<0.000000e+00> : vector<16xf32>
    %45 = vector.multi_reduction <add>, %44, %cst_8 [1] : vector<16x128xf32> to vector<16xf32>
    %46 = vector.shape_cast %45 : vector<16xf32> to vector<16x1xf32>
    %47 = arith.addf %11, %46 : vector<16x1xf32>
    %c0_9 = arith.constant 0 : index
    %c128 = arith.constant 128 : index
    %48 = vector.load %arg2[%c0_9, %c128] : memref<16x256xf32, #tpu.memory_space<vmem>>, vector<16x128xf32>
    %c120_i32_10 = arith.constant 120 : i32
    %49 = tpu.dynamic_rotate %48 by %c120_i32_10 dim 1 : vector<16x128xf32>, i32 -> vector<16x128xf32>
    %c6 = arith.constant 6 : index
    %50 = memref.load %arg1[%c6] : memref<12xf32, #tpu.memory_space<smem>>
    %51 = vector.broadcast %50 : f32 to vector<16x128xf32>
    %52 = arith.mulf %51, %48 : vector<16x128xf32>
    %c7 = arith.constant 7 : index
    %53 = memref.load %arg1[%c7] : memref<12xf32, #tpu.memory_space<smem>>
    %54 = vector.broadcast %53 : f32 to vector<16x128xf32>
    %55 = arith.mulf %54, %49 : vector<16x128xf32>
    %56 = arith.addf %52, %55 : vector<16x128xf32>
    %c8 = arith.constant 8 : index
    %57 = memref.load %arg1[%c8] : memref<12xf32, #tpu.memory_space<smem>>
    %58 = vector.broadcast %57 : f32 to vector<16x128xf32>
    %59 = arith.addf %56, %58 : vector<16x128xf32>
    %c9 = arith.constant 9 : index
    %60 = memref.load %arg1[%c9] : memref<12xf32, #tpu.memory_space<smem>>
    %61 = vector.broadcast %60 : f32 to vector<16x128xf32>
    %62 = arith.mulf %61, %48 : vector<16x128xf32>
    %c10 = arith.constant 10 : index
    %63 = memref.load %arg1[%c10] : memref<12xf32, #tpu.memory_space<smem>>
    %64 = vector.broadcast %63 : f32 to vector<16x128xf32>
    %65 = arith.mulf %64, %49 : vector<16x128xf32>
    %66 = arith.addf %62, %65 : vector<16x128xf32>
    %c11 = arith.constant 11 : index
    %67 = memref.load %arg1[%c11] : memref<12xf32, #tpu.memory_space<smem>>
    %68 = vector.broadcast %67 : f32 to vector<16x128xf32>
    %69 = arith.addf %66, %68 : vector<16x128xf32>
    %70 = arith.mulf %59, %59 : vector<16x128xf32>
    %71 = arith.mulf %69, %69 : vector<16x128xf32>
    %72 = arith.addf %70, %71 : vector<16x128xf32>
    %73 = math.sqrt %72 : vector<16x128xf32>
    %cst_11 = arith.constant 0.000000e+00 : f32
    %74 = vector.broadcast %cst_11 : f32 to vector<16x128xf32>
    %75 = arith.select %9, %73, %74 : vector<16x128xi1>, vector<16x128xf32>
    %c0_12 = arith.constant 0 : index
    %c128_13 = arith.constant 128 : index
    %76 = vector.load %arg3[%c0_12, %c128_13] : memref<16x256xf32, #tpu.memory_space<vmem>>, vector<16x128xf32>
    tpu.vector_store %arg3[%c0_12, %c128_13], %75 {strides = array<i32>} : memref<16x256xf32, #tpu.memory_space<vmem>>, vector<16x128xf32>,
    %cst_14 = arith.constant dense<0.000000e+00> : vector<16xf32>
    %77 = vector.multi_reduction <add>, %75, %cst_14 [1] : vector<16x128xf32> to vector<16xf32>
    %78 = vector.shape_cast %77 : vector<16xf32> to vector<16x1xf32>
    %79 = arith.addf %43, %78 : vector<16x1xf32>
    %80 = arith.mulf %75, %75 : vector<16x128xf32>
    %cst_15 = arith.constant dense<0.000000e+00> : vector<16xf32>
    %81 = vector.multi_reduction <add>, %80, %cst_15 [1] : vector<16x128xf32> to vector<16xf32>
    %82 = vector.shape_cast %81 : vector<16xf32> to vector<16x1xf32>
    %83 = arith.addf %47, %82 : vector<16x1xf32>
    %c0_16 = arith.constant 0 : index
    %c0_17 = arith.constant 0 : index
    %84 = vector.load %arg4[%c0_16, %c0_17] : memref<16x2xf32, #tpu.memory_space<vmem>>, vector<16x1xf32>
    tpu.vector_store %arg4[%c0_16, %c0_17], %79 {strides = array<i32>} : memref<16x2xf32, #tpu.memory_space<vmem>>, vector<16x1xf32>,
    %c0_18 = arith.constant 0 : index
    %c1_19 = arith.constant 1 : index
    %85 = vector.load %arg4[%c0_18, %c1_19] : memref<16x2xf32, #tpu.memory_space<vmem>>, vector<16x1xf32>
    tpu.vector_store %arg4[%c0_18, %c1_19], %83 {strides = array<i32>} : memref<16x2xf32, #tpu.memory_space<vmem>>, vector<16x1xf32>,
    return
  }
  func.func @transform_0(%arg0: i32, %arg1: memref<12xf32, #tpu.memory_space<smem>>) -> (i32, i32) {
    %c0_i32 = arith.constant 0 : i32
    %c0_i32_0 = arith.constant 0 : i32
    return %arg0, %c0_i32 : i32, i32
  }
  func.func @transform_1(%arg0: i32, %arg1: memref<12xf32, #tpu.memory_space<smem>>) -> (i32, i32) {
    %c0_i32 = arith.constant 0 : i32
    %c0_i32_0 = arith.constant 0 : i32
    return %arg0, %c0_i32 : i32, i32
  }
  func.func @transform_2(%arg0: i32, %arg1: memref<12xf32, #tpu.memory_space<smem>>) -> (i32, i32) {
    %c0_i32 = arith.constant 0 : i32
    %c0_i32_0 = arith.constant 0 : i32
    return %arg0, %c0_i32 : i32, i32
  }
}

</mosaic_0001>

<llo_original>
// kernel: mul.14
$region0: #{mul.14}
  %s0 = inlined_call_operand.vmem [shape: f32[2,2], index: 0, kind: input, shape index: {}]
  %s1 = inlined_call_operand.vmem [shape: f32[4], index: 1, kind: output, shape index: {}]
  $region1: #{mul.14} parent=0
    #allocation0 [shape = 'u8[4096]{0}', space=vmem, size = 0x1000, scoped, tag = 'scoped mem for output reshape']
    #allocation1 [shape = 'u8[4096]{0}', space=vmem, size = 0x1000, scoped, tag = 'scoped mem for input reshape']
    %s3 = ssub.s32 4, 1
    %v4 = vld [vmem:[%s0] sm:%s3]
    %5 = vst [vmem:[#allocation1] sm:%s3] %v4
    %v6 = vld [vmem:[#allocation1] sm:$0x1]
    %vm7 = vcmask 15360
    %8 = vst.msk [vmem:[#allocation0] sm:$0x1] %vm7, %v6
    %s9 = scalar_lea.vmem [#allocation1], 1
    %v10 = vld [vmem:[%s9] sm:$0x1]
    %11 = vrot.lane.b32.xlu0 %v10, 2
    %v12 = vpop.permute.xlu0 %11
    %vm13 = vcmask 31760
    %14 = vst.msk [vmem:[#allocation0] sm:$0x1] %vm13, %v12
    %s16 = ssub.s32 2, 1
    %v17 = vld [vmem:[#allocation0] sm:%s16]
    %s19 = ssub.s32 2, 1
    %20 = vst [vmem:[%s1] sm:%s19] %v17

// kernel: donet_forward.2
$region0: #{donet_forward.2}
  #allocation0 [shape = 'u32[]', space=smem, size = 0x4, offset = 0x4, fixed_abs, tag = 'smem constant byte address 0x4 - core index']
  #allocation1 [shape = 'u32[72,128]{1,0:T(1,128)}', space=vmem, size = 0x9000, scoped, tag = 'internal scratch']
  #allocation2 [shape = 'f32[16,128]{1,0:T(8,128)}', space=vmem, size = 0x2000, scoped, tag = 'scratch operand']
  %s0 = inlined_call_operand.vmem [shape: f32[2,4,128], index: 0, kind: input, shape index: {}]
  %s1 = inlined_call_operand.vmem [shape: f32[8,4], index: 1, kind: input, shape index: {}]
  %s2 = inlined_call_operand.vmem [shape: f32[128,256], index: 2, kind: input, shape index: {}]
  %s3 = inlined_call_operand.vmem [shape: f32[16,256], index: 3, kind: output, shape index: {0}]
  %s4 = inlined_call_operand.vmem [shape: f32[1,2,256], index: 4, kind: output, shape index: {1}]
  %5 = xla_tuple %s3, %s4
  %s6 = sld [smem:[#allocation0]]
  $region30: #{donet_forward.2} parent=0
    _
  %s8 = ssub.s32 1, %s6
  %s9 = scalar_select 0, %s8, %s6
  // Predicated region
  $region2: #{donet_forward.2} parent=0 // pred_check
    _
  $region3: #{donet_forward.2} parent=0 // pred_check_branch
    %11 = sbr.rel (0) target = $region5
  $region4: #{donet_forward.2} parent=0 // pred_region
    _
  $region5: #{donet_forward.2} parent=0 // pred_fallthru
    _
  // Predicated region
  $region6: #{donet_forward.2} parent=0 // pred_check
    _
  $region7: #{donet_forward.2} parent=0 // pred_check_branch
    %13 = sbr.rel (0) target = $region9
  $region8: #{donet_forward.2} parent=0 // pred_region
    _
  $region9: #{donet_forward.2} parent=0 // pred_fallthru
    _
  // Predicated region
  $region10: #{donet_forward.2} parent=0 // pred_check
    _
  $region11: #{donet_forward.2} parent=0 // pred_check_branch
    %15 = sbr.rel (0) target = $region13
  $region12: #{donet_forward.2} parent=0 // pred_region
    _
  $region13: #{donet_forward.2} parent=0 // pred_fallthru
    _
  %v16 = vld [vmem:[%s1] sm:$0xff]
  %v17 = vld [vmem:[%s0] sm:$0xf]
  %vm18 = vcmask 31744
  %v20 = vsel %vm18, %v16, 0
  %vm22 = vcmask 1043456
  %v24 = vsel %vm22, %v17, 0
  %26 = vmatpush.msra.mxu0 0.0
  %27 = vmatpush.msra.mxu0 0.0
  %28 = vmatpush.msra.mxu0 0.0
  %29 = vmatpush.msra.mxu0 0.0
  %30 = vmatpush.msra.mxu0 0.0
  %31 = vmatpush.msra.mxu0 0.0
  %32 = vmatpush.msra.mxu0 0.0
  %33 = vmatpush.msra.mxu0 0.0
  %34 = vmatpush.msra.mxu0 0.0
  %35 = vmatpush.msra.mxu0 0.0
  %36 = vmatpush.msra.mxu0 0.0
  %37 = vmatpush.msra.mxu0 0.0
  %38 = vmatpush.msra.mxu0 0.0
  %39 = vmatpush.msra.mxu0 0.0
  %40 = vmatpush.msra.mxu0 0.0
  %41 = vmatpush.msra.mxu0 %v24
  %42 = vmatmul.f32.gmra.mxu0 %v20
  %v43 = vpop.f32.mrf.mxu0
  %v44 = vadd.f32 0.0, %v43
  %45 = vdwg.mxu0
  %46 = vst [vmem:[#allocation2] sm:$0xff] %v44
  %s47 = scalar_lea.vmem %s0, 4
  %v48 = vld [vmem:[%s47] sm:$0xf]
  %v50 = vsel %vm22, %v48, 0
  %52 = vmatpush.msra.mxu0 0.0
  %53 = vmatpush.msra.mxu0 0.0
  %54 = vmatpush.msra.mxu0 0.0
  %55 = vmatpush.msra.mxu0 0.0
  %56 = vmatpush.msra.mxu0 0.0
  %57 = vmatpush.msra.mxu0 0.0
  %58 = vmatpush.msra.mxu0 0.0
  %59 = vmatpush.msra.mxu0 0.0
  %60 = vmatpush.msra.mxu0 0.0
  %61 = vmatpush.msra.mxu0 0.0
  %62 = vmatpush.msra.mxu0 0.0
  %63 = vmatpush.msra.mxu0 0.0
  %64 = vmatpush.msra.mxu0 0.0
  %65 = vmatpush.msra.mxu0 0.0
  %66 = vmatpush.msra.mxu0 0.0
  %67 = vmatpush.msra.mxu0 %v50
  %68 = vmatmul.f32.gmra.mxu0 %v20
  %v69 = vpop.f32.mrf.mxu0
  %v70 = vadd.f32 0.0, %v69
  %71 = vdwg.mxu0
  %72 = vst [vmem:[#allocation2 + $0x8] sm:$0xff] %v70
  %v73 = vld [vmem:[#allocation2] sm:$0xff]
  %v74 = vld [vmem:[#allocation2 + $0x8] sm:$0xff]
  %v75 = vld [vmem:[%s2] sm:$0xff]
  %v76 = vld [vmem:[%s2 + $0x8] sm:$0xff]
  %v77 = vld [vmem:[%s2 + $0x10] sm:$0xff]
  %v78 = vld [vmem:[%s2 + $0x18] sm:$0xff]
  %v79 = vld [vmem:[%s2 + $0x20] sm:$0xff]
  %v80 = vld [vmem:[%s2 + $0x28] sm:$0xff]
  %v81 = vld [vmem:[%s2 + $0x30] sm:$0xff]
  %v82 = vld [vmem:[%s2 + $0x38] sm:$0xff]
  %v83 = vld [vmem:[%s2 + $0x40] sm:$0xff]
  %v84 = vld [vmem:[%s2 + $0x48] sm:$0xff]
  %v85 = vld [vmem:[%s2 + $0x50] sm:$0xff]
  %v86 = vld [vmem:[%s2 + $0x58] sm:$0xff]
  %v87 = vld [vmem:[%s2 + $0x60] sm:$0xff]
  %v88 = vld [vmem:[%s2 + $0x68] sm:$0xff]
  %v89 = vld [vmem:[%s2 + $0x70] sm:$0xff]
  %v90 = vld [vmem:[%s2 + $0x78] sm:$0xff]
  %v91 = vld [vmem:[%s2 + $0x80] sm:$0xff]
  %v92 = vld [vmem:[%s2 + $0x88] sm:$0xff]
  %v93 = vld [vmem:[%s2 + $0x90] sm:$0xff]
  %v94 = vld [vmem:[%s2 + $0x98] sm:$0xff]
  %v95 = vld [vmem:[%s2 + $0xa0] sm:$0xff]
  %v96 = vld [vmem:[%s2 + $0xa8] sm:$0xff]
  %v97 = vld [vmem:[%s2 + $0xb0] sm:$0xff]
  %v98 = vld [vmem:[%s2 + $0xb8] sm:$0xff]
  %v99 = vld [vmem:[%s2 + $0xc0] sm:$0xff]
  %v100 = vld [vmem:[%s2 + $0xc8] sm:$0xff]
  %v101 = vld [vmem:[%s2 + $0xd0] sm:$0xff]
  %v102 = vld [vmem:[%s2 + $0xd8] sm:$0xff]
  %v103 = vld [vmem:[%s2 + $0xe0] sm:$0xff]
  %v104 = vld [vmem:[%s2 + $0xe8] sm:$0xff]
  %v105 = vld [vmem:[%s2 + $0xf0] sm:$0xff]
  %v106 = vld [vmem:[%s2 + $0xf8] sm:$0xff]
  %107 = vmatpush.msra.mxu0 %v105
  %108 = vmatpush.msra.mxu0 %v103
  %109 = vmatpush.msra.mxu0 %v101
  %110 = vmatpush.msra.mxu0 %v99
  %111 = vmatpush.msra.mxu0 %v97
  %112 = vmatpush.msra.mxu0 %v95
  %113 = vmatpush.msra.mxu0 %v93
  %114 = vmatpush.msra.mxu0 %v91
  %115 = vmatpush.msra.mxu0 %v89
  %116 = vmatpush.msra.mxu0 %v87
  %117 = vmatpush.msra.mxu0 %v85
  %118 = vmatpush.msra.mxu0 %v83
  %119 = vmatpush.msra.mxu0 %v81
  %120 = vmatpush.msra.mxu0 %v79
  %121 = vmatpush.msra.mxu0 %v77
  %122 = vmatpush.msra.mxu0 %v75
  %123 = vmatmul.f32.gmra.mxu0 %v73
  %v124 = vpop.f32.mrf.mxu0
  %v125 = vadd.f32 0.0, %v124
  %126 = vmatmul.f32.gmra.mxu0 %v74
  %v127 = vpop.f32.mrf.mxu0
  %v128 = vadd.f32 0.0, %v127
  %129 = vdwg.mxu0
  %130 = vmatpush.msra.mxu0 %v106
  %131 = vmatpush.msra.mxu0 %v104
  %132 = vmatpush.msra.mxu0 %v102
  %133 = vmatpush.msra.mxu0 %v100
  %134 = vmatpush.msra.mxu0 %v98
  %135 = vmatpush.msra.mxu0 %v96
  %136 = vmatpush.msra.mxu0 %v94
  %137 = vmatpush.msra.mxu0 %v92
  %138 = vmatpush.msra.mxu0 %v90
  %139 = vmatpush.msra.mxu0 %v88
  %140 = vmatpush.msra.mxu0 %v86
  %141 = vmatpush.msra.mxu0 %v84
  %142 = vmatpush.msra.mxu0 %v82
  %143 = vmatpush.msra.mxu0 %v80
  %144 = vmatpush.msra.mxu0 %v78
  %145 = vmatpush.msra.mxu0 %v76
  %146 = vmatmul.f32.gmra.mxu0 %v73
  %v147 = vpop.f32.mrf.mxu0
  %v148 = vadd.f32 0.0, %v147
  %149 = vmatmul.f32.gmra.mxu0 %v74
  %v150 = vpop.f32.mrf.mxu0
  %v151 = vadd.f32 0.0, %v150
  %152 = vdwg.mxu0
  %153 = vst [vmem:[%s3] sm:$0xff] %v125
  %154 = vst [vmem:[%s3 + $0x8] sm:$0xff] %v148
  %155 = vst [vmem:[%s3 + $0x10] sm:$0xff] %v128
  %156 = vst [vmem:[%s3 + $0x18] sm:$0xff] %v151
  %v157 = vadd.f32 %v125, %v128
  %v158 = vrot.slane %v157, 4
  %v159 = vadd.f32 %v157, %v158
  %v160 = vrot.slane %v159, 2
  %v161 = vadd.f32 %v159, %v160
  %v162 = vrot.slane %v161, 1
  %v163 = vadd.f32 %v161, %v162
  %v164 = vadd.f32 %v148, %v151
  %v165 = vrot.slane %v164, 4
  %v166 = vadd.f32 %v164, %v165
  %v167 = vrot.slane %v166, 2
  %v168 = vadd.f32 %v166, %v167
  %v169 = vrot.slane %v168, 1
  %v170 = vadd.f32 %v168, %v169
  %v173 = vrot.slane %v170, 7
  %vm174 = vcmask 1040384
  %v175 = vsel %vm174, %v163, %v173
  %v177 = vlaneseq
  %vm178 = vcmp.ge.s32.totalorder %v177, 0
  %vm179 = vcmp.lt.s32.totalorder %v177, 256
  %vm180 = vmand %vm178, %vm179
  %181 = vst.msk [vmem:[%s4] ss:$2 sm:$0x3] %vm180, %v175
  %v182 = vmul.f32 %v125, %v125
  %v183 = vmul.f32 %v148, %v148
  %v184 = vmul.f32 %v128, %v128
  %v185 = vmul.f32 %v151, %v151
  %v186 = vadd.f32 %v182, %v184
  %v187 = vrot.slane %v186, 4
  %v188 = vadd.f32 %v186, %v187
  %v189 = vrot.slane %v188, 2
  %v190 = vadd.f32 %v188, %v189
  %v191 = vrot.slane %v190, 1
  %v192 = vadd.f32 %v190, %v191
  %v193 = vadd.f32 %v183, %v185
  %v194 = vrot.slane %v193, 4
  %v195 = vadd.f32 %v193, %v194
  %v196 = vrot.slane %v195, 2
  %v197 = vadd.f32 %v195, %v196
  %v198 = vrot.slane %v197, 1
  %v199 = vadd.f32 %v197, %v198
  %v202 = vrot.slane %v199, 7
  %v203 = vsel %vm174, %v192, %v202
  %s205 = scalar_lea.vmem %s4, 1
  %206 = vst.msk [vmem:[%s205] ss:$2 sm:$0x3] %vm180, %v203
  // Predicated region
  $region14: #{donet_forward.2} parent=0 // pred_check
    _
  $region15: #{donet_forward.2} parent=0 // pred_check_branch
    %208 = sbr.rel (0) target = $region17
  $region16: #{donet_forward.2} parent=0 // pred_region
    _
  $region17: #{donet_forward.2} parent=0 // pred_fallthru
    _
  // Predicated region
  $region18: #{donet_forward.2} parent=0 // pred_check
    _
  $region19: #{donet_forward.2} parent=0 // pred_check_branch
    %210 = sbr.rel (0) target = $region21
  $region20: #{donet_forward.2} parent=0 // pred_region
    _
  $region21: #{donet_forward.2} parent=0 // pred_fallthru
    _
  // Predicated region
  $region22: #{donet_forward.2} parent=0 // pred_check
    _
  $region23: #{donet_forward.2} parent=0 // pred_check_branch
    %212 = sbr.rel (0) target = $region25
  $region24: #{donet_forward.2} parent=0 // pred_region
    _
  $region25: #{donet_forward.2} parent=0 // pred_fallthru
    _
  // Predicated region
  $region26: #{donet_forward.2} parent=0 // pred_check
    _
  $region27: #{donet_forward.2} parent=0 // pred_check_branch
    %214 = sbr.rel (0) target = $region29
  $region28: #{donet_forward.2} parent=0 // pred_region
    _
  $region29: #{donet_forward.2} parent=0 // pred_fallthru
    _

// kernel: donet_forward.3
$region0: #{donet_forward.3}
  #allocation0 [shape = 'u32[]', space=smem, size = 0x4, offset = 0x4, fixed_abs, tag = 'smem constant byte address 0x4 - core index']
  #allocation1 [shape = 'u32[72,128]{1,0:T(1,128)}', space=vmem, size = 0x9000, scoped, tag = 'internal scratch']
  #allocation2 [shape = 's32[1]{0}', space=sflag, size = 0x4, scoped, tag = 'scoped memory for donet_forward.3']
  #allocation3 [shape = 'u8[512]{0}', space=smem, size = 0x200, scoped, tag = 'prefetched SMEM operand 0']
  %s0 = inlined_call_operand.vmem [shape: f32[12], index: 0, kind: input, shape index: {}]
  %s1 = inlined_call_operand.vmem [shape: f32[16,256], index: 1, kind: input, shape index: {}]
  %s2 = inlined_call_operand.vmem [shape: f32[16,256], index: 2, kind: output, shape index: {0}]
  %s3 = inlined_call_operand.vmem [shape: f32[16,2], index: 3, kind: output, shape index: {1}]
  %4 = xla_tuple %s2, %s3
  %s5 = sld [smem:[#allocation0]]
  $region22: #{donet_forward.3} parent=0
    _
  %s7 = ssub.s32 1, %s5
  %s8 = scalar_select 0, %s7, %s5
  %s10 = sshll.u32 %s0, 4
  %s11 = int_to_ptr.vmem [resolvable:$true] %s10
  %13 = dma.vmem_to_smem %s11, 16, [#allocation3], [#allocation2]
  %15 = dma.done [#allocation2], 16
  %16 = sfence
  // Predicated region
  $region2: #{donet_forward.3} parent=0 // pred_check
    _
  $region3: #{donet_forward.3} parent=0 // pred_check_branch
    %18 = sbr.rel (0) target = $region5
  $region4: #{donet_forward.3} parent=0 // pred_region
    _
  $region5: #{donet_forward.3} parent=0 // pred_fallthru
    _
  %v19 = vlaneseq
  %v20 = vand.u32 %v19, 127
  %v21 = vlaneseq
  %v22 = vshrl.u32 %v21, 7
  %v23 = vadd.s32 %v22, 8
  %s24 = smul.u32 0, 16
  %v25 = vstv %s24
  %v26 = vadd.s32 %v22, %v25
  %v27 = vadd.s32 %v23, %v25
  %vm28 = vcmp.lt.s32.totalorder %v20, 112
  %vm29 = vcmp.lt.s32.totalorder %v26, 16
  %vm30 = vcmp.lt.s32.totalorder %v27, 16
  %vm31 = vmand %vm28, %vm29
  %vm32 = vmand %vm28, %vm30
  %v33 = vld [vmem:[%s1] sm:$0xff]
  %v34 = vld [vmem:[%s1 + $0x10] sm:$0xff]
  %35 = vrot.lane.b32.xlu0 %v33, 120
  %v36 = vpop.permute.xlu0 %35
  %37 = vrot.lane.b32.xlu0 %v34, 120
  %v38 = vpop.permute.xlu0 %37
  %s39 = sld [smem:[#allocation3]]
  %v40 = vstv %s39
  %v41 = vmul.f32 %v40, %v33
  %v42 = vmul.f32 %v40, %v34
  %s43 = sld [smem:[#allocation3 + $0x1]]
  %v44 = vstv %s43
  %v45 = vmul.f32 %v44, %v36
  %v46 = vmul.f32 %v44, %v38
  %v47 = vadd.f32 %v41, %v45
  %v48 = vadd.f32 %v42, %v46
  %s49 = sld [smem:[#allocation3 + $0x2]]
  %v50 = vstv %s49
  %v51 = vadd.f32 %v47, %v50
  %v52 = vadd.f32 %v48, %v50
  %s53 = sld [smem:[#allocation3 + $0x3]]
  %v54 = vstv %s53
  %v55 = vmul.f32 %v54, %v33
  %v56 = vmul.f32 %v54, %v34
  %s57 = sld [smem:[#allocation3 + $0x4]]
  %v58 = vstv %s57
  %v59 = vmul.f32 %v58, %v36
  %v60 = vmul.f32 %v58, %v38
  %v61 = vadd.f32 %v55, %v59
  %v62 = vadd.f32 %v56, %v60
  %s63 = sld [smem:[#allocation3 + $0x5]]
  %v64 = vstv %s63
  %v65 = vadd.f32 %v61, %v64
  %v66 = vadd.f32 %v62, %v64
  %v67 = vmul.f32 %v51, %v51
  %v68 = vmul.f32 %v52, %v52
  %v69 = vmul.f32 %v65, %v65
  %v70 = vmul.f32 %v66, %v66
  %v71 = vadd.f32 %v67, %v69
  %v72 = vadd.f32 %v68, %v70
  %v73 = vrsqrt.pop %v71
  %v74 = vmul.f32 %v73, %v71
  %v75 = vmul.f32 %v74, %v73
  %v76 = vmul.f32 0.5, %v75
  %v77 = vsub.f32 1.5, %v76
  %v78 = vmul.f32 %v73, %v77
  %v79 = vmul.f32 %v71, %v78
  %vm80 = vcmp.eq.f32.partialorder %v71, inf
  %v81 = vsel %vm80, %v71, %v79
  %vm82 = vcmp.eq.f32.partialorder %v71, 0.0
  %v83 = vand.u32 %v71, 2147483648
  %v84 = vsel %vm82, %v83, %v81
  %v85 = vrsqrt.pop %v72
  %v86 = vmul.f32 %v85, %v72
  %v87 = vmul.f32 %v86, %v85
  %v88 = vmul.f32 0.5, %v87
  %v89 = vsub.f32 1.5, %v88
  %v90 = vmul.f32 %v85, %v89
  %v91 = vmul.f32 %v72, %v90
  %vm92 = vcmp.eq.f32.partialorder %v72, inf
  %v93 = vsel %vm92, %v72, %v91
  %vm94 = vcmp.eq.f32.partialorder %v72, 0.0
  %v95 = vand.u32 %v72, 2147483648
  %v96 = vsel %vm94, %v95, %v93
  %v97 = vsel %vm31, %v84, 0.0
  %v98 = vsel %vm32, %v96, 0.0
  %99 = vst [vmem:[%s2] sm:$0xff] %v97
  %100 = vst [vmem:[%s2 + $0x10] sm:$0xff] %v98
  %101 = vadd.xlane.f32.xlu0 %v97
  %v102 = vpop.xlane.xlu0 %101
  %103 = vadd.xlane.f32.xlu0 %v98
  %v104 = vpop.xlane.xlu0 %103
  %v105 = vadd.f32 %v102, 0.0
  %v106 = vadd.f32 %v104, 0.0
  %v107 = vmul.f32 %v97, %v97
  %v108 = vmul.f32 %v98, %v98
  %109 = vadd.xlane.f32.xlu0 %v107
  %v110 = vpop.xlane.xlu0 %109
  %111 = vadd.xlane.f32.xlu0 %v108
  %v112 = vpop.xlane.xlu0 %111
  %v113 = vadd.f32 %v110, 0.0
  %v114 = vadd.f32 %v112, 0.0
  %v115 = vld [vmem:[%s1 + $0x8] sm:$0xff]
  %v116 = vld [vmem:[%s1 + $0x18] sm:$0xff]
  %117 = vrot.lane.b32.xlu0 %v115, 120
  %v118 = vpop.permute.xlu0 %117
  %119 = vrot.lane.b32.xlu0 %v116, 120
  %v120 = vpop.permute.xlu0 %119
  %s121 = sld [smem:[#allocation3 + $0x6]]
  %v122 = vstv %s121
  %v123 = vmul.f32 %v122, %v115
  %v124 = vmul.f32 %v122, %v116
  %s125 = sld [smem:[#allocation3 + $0x7]]
  %v126 = vstv %s125
  %v127 = vmul.f32 %v126, %v118
  %v128 = vmul.f32 %v126, %v120
  %v129 = vadd.f32 %v123, %v127
  %v130 = vadd.f32 %v124, %v128
  %s131 = sld [smem:[#allocation3 + $0x8]]
  %v132 = vstv %s131
  %v133 = vadd.f32 %v129, %v132
  %v134 = vadd.f32 %v130, %v132
  %s135 = sld [smem:[#allocation3 + $0x9]]
  %v136 = vstv %s135
  %v137 = vmul.f32 %v136, %v115
  %v138 = vmul.f32 %v136, %v116
  %s139 = sld [smem:[#allocation3 + $0xa]]
  %v140 = vstv %s139
  %v141 = vmul.f32 %v140, %v118
  %v142 = vmul.f32 %v140, %v120
  %v143 = vadd.f32 %v137, %v141
  %v144 = vadd.f32 %v138, %v142
  %s145 = sld [smem:[#allocation3 + $0xb]]
  %v146 = vstv %s145
  %v147 = vadd.f32 %v143, %v146
  %v148 = vadd.f32 %v144, %v146
  %v149 = vmul.f32 %v133, %v133
  %v150 = vmul.f32 %v134, %v134
  %v151 = vmul.f32 %v147, %v147
  %v152 = vmul.f32 %v148, %v148
  %v153 = vadd.f32 %v149, %v151
  %v154 = vadd.f32 %v150, %v152
  %v155 = vrsqrt.pop %v153
  %v156 = vmul.f32 %v155, %v153
  %v157 = vmul.f32 %v156, %v155
  %v158 = vmul.f32 0.5, %v157
  %v159 = vsub.f32 1.5, %v158
  %v160 = vmul.f32 %v155, %v159
  %v161 = vmul.f32 %v153, %v160
  %vm162 = vcmp.eq.f32.partialorder %v153, inf
  %v163 = vsel %vm162, %v153, %v161
  %vm164 = vcmp.eq.f32.partialorder %v153, 0.0
  %v165 = vand.u32 %v153, 2147483648
  %v166 = vsel %vm164, %v165, %v163
  %v167 = vrsqrt.pop %v154
  %v168 = vmul.f32 %v167, %v154
  %v169 = vmul.f32 %v168, %v167
  %v170 = vmul.f32 0.5, %v169
  %v171 = vsub.f32 1.5, %v170
  %v172 = vmul.f32 %v167, %v171
  %v173 = vmul.f32 %v154, %v172
  %vm174 = vcmp.eq.f32.partialorder %v154, inf
  %v175 = vsel %vm174, %v154, %v173
  %vm176 = vcmp.eq.f32.partialorder %v154, 0.0
  %v177 = vand.u32 %v154, 2147483648
  %v178 = vsel %vm176, %v177, %v175
  %v179 = vsel %vm31, %v166, 0.0
  %v180 = vsel %vm32, %v178, 0.0
  %181 = vst [vmem:[%s2 + $0x8] sm:$0xff] %v179
  %182 = vst [vmem:[%s2 + $0x18] sm:$0xff] %v180
  %183 = vadd.xlane.f32.xlu0 %v179
  %v184 = vpop.xlane.xlu0 %183
  %185 = vadd.xlane.f32.xlu0 %v180
  %v186 = vpop.xlane.xlu0 %185
  %v187 = vadd.f32 %v105, %v184
  %v188 = vadd.f32 %v106, %v186
  %v189 = vmul.f32 %v179, %v179
  %v190 = vmul.f32 %v180, %v180
  %191 = vadd.xlane.f32.xlu0 %v189
  %v192 = vpop.xlane.xlu0 %191
  %193 = vadd.xlane.f32.xlu0 %v190
  %v194 = vpop.xlane.xlu0 %193
  %v195 = vadd.f32 %v113, %v192
  %v196 = vadd.f32 %v114, %v194
  %vm197 = vcmask 7168
  %198 = vst.msk [vmem:[%s3] sm:$0xff] %vm197, %v187
  %199 = vst.msk [vmem:[%s3 + $0x8] sm:$0xff] %vm197, %v188
  %vm200 = vcmask 15368
  %201 = vst.msk [vmem:[%s3] sm:$0xff] %vm200, %v195
  %202 = vst.msk [vmem:[%s3 + $0x8] sm:$0xff] %vm200, %v196
  // Predicated region
  $region6: #{donet_forward.3} parent=0 // pred_check
    _
  $region7: #{donet_forward.3} parent=0 // pred_check_branch
    %204 = sbr.rel (0) target = $region9
  $region8: #{donet_forward.3} parent=0 // pred_region
    _
  $region9: #{donet_forward.3} parent=0 // pred_fallthru
    _
  // Predicated region
  $region10: #{donet_forward.3} parent=0 // pred_check
    _
  $region11: #{donet_forward.3} parent=0 // pred_check_branch
    %206 = sbr.rel (0) target = $region13
  $region12: #{donet_forward.3} parent=0 // pred_region
    _
  $region13: #{donet_forward.3} parent=0 // pred_fallthru
    _
  // Predicated region
  $region14: #{donet_forward.3} parent=0 // pred_check
    _
  $region15: #{donet_forward.3} parent=0 // pred_check_branch
    %208 = sbr.rel (0) target = $region17
  $region16: #{donet_forward.3} parent=0 // pred_region
    _
  $region17: #{donet_forward.3} parent=0 // pred_fallthru
    _
  // Predicated region
  $region18: #{donet_forward.3} parent=0 // pred_check
    _
  $region19: #{donet_forward.3} parent=0 // pred_check_branch
    %210 = sbr.rel (0) target = $region21
  $region20: #{donet_forward.3} parent=0 // pred_region
    _
  $region21: #{donet_forward.3} parent=0 // pred_fallthru
    _

</llo_original>
